<compile_context>
chip_gen: v7x
topology: tpu7x:2x2x1
jax: 0.10.0
libtpu: 0.0.40
codegen_flags: <defaults>
</compile_context>

<pallas_src>
import math

import jax
import jax.numpy as jnp
from jax.experimental import pallas as pl
from jax.experimental.pallas import tpu as pltpu


def _normalize_kernel(x_ref, mean_ref, inv_std_ref, o_ref):
    # x_ref: (tile_rows, width); mean/inv_std: (1, width) f32, broadcast over rows.
    x = x_ref[...].astype(jnp.float32)
    o_ref[...] = ((x - mean_ref[...]) * inv_std_ref[...]).astype(o_ref.dtype)


def _round_up(n, m):
    return ((n + m - 1) // m) * m


def _chip_config():
    """Returns (num_cores_guess, vmem_limit_bytes, target_block_bytes)."""
    vmem_cap = 64 * 1024 * 1024  # conservative fallback: assume v7x-sized VMEM
    try:
        info = pltpu.get_tpu_info()
        vmem_cap = int(getattr(info, "vmem_capacity_bytes", vmem_cap))
    except Exception:
        pass
    multi_core = vmem_cap <= 64 * 1024 * 1024          # v7x: 2 TCs, 64 MiB VMEM/TC
    num_cores = 2 if multi_core else 1                 # v5e/v6e: 1 TC, 128 MiB
    vmem_limit = min((vmem_cap * 3) // 4, 96 * 1024 * 1024)
    # Double-buffered input + output ~= 4x block; keep that under the limit.
    target_block = min(8 * 1024 * 1024, vmem_limit // 5)
    return num_cores, vmem_limit, target_block


def _pick_width(n_total, c, cap=2048):
    """Pick a lane-dense row width.

    Returns (width, padded_total).  width is a multiple of both c (so the
    channel pattern tiles exactly per row) and 128 (unmasked dense stores).
    Prefers the smallest dense width dividing n_total with >= 8 rows, else any
    dense divisor, else pads the flat element count to a ~512-wide dense row.
    """
    base = (c * 128) // math.gcd(c, 128)  # lcm(c, 128)
    divisors = [w for w in range(base, cap + 1, base) if n_total % w == 0]
    for w in divisors:
        if n_total // w >= 8:
            return w, n_total
    if divisors:
        return divisors[0], n_total
    w = base * max(1, 512 // base)
    return w, _round_up(n_total, w)


def normalizer_forward(x, mean, std):
    """(x - mean) / std, broadcasting mean/std over the last axis of x."""
    c = mean.shape[0]
    assert x.shape[-1] == c and std.shape[0] == c
    orig_shape = x.shape

    # Match torch type promotion; all arithmetic happens in f32 in the kernel.
    if not jnp.issubdtype(x.dtype, jnp.floating):
        x = x.astype(jnp.float32)
    out_dtype = jnp.result_type(x.dtype, mean.dtype, std.dtype)

    n_total = 1
    for d in orig_shape:
        n_total *= d

    num_cores, vmem_limit, target_block_bytes = _chip_config()

    # Precompute f32 scale/offset (kept f32 end-to-end inside the kernel).
    mean_f32 = mean.astype(jnp.float32)
    inv_std_f32 = 1.0 / std.astype(jnp.float32)

    width, padded_total = _pick_width(n_total, c)
    rows = padded_total // width
    g = width // c

    x_flat = x.reshape(-1)
    if padded_total != n_total:
        # Tail pad only (< one row of extra traffic); keeps stores lane-dense.
        x_flat = jnp.pad(x_flat, (0, padded_total - n_total))
    x2 = x_flat.reshape(rows, width)

    mean2 = jnp.tile(mean_f32, g).reshape(1, width)       # (1, width) f32
    inv2 = jnp.tile(inv_std_f32, g).reshape(1, width)     # (1, width) f32

    # Row tiling: big full-width (contiguous-in-HBM) blocks, near-equal sizes.
    in_itemsize = jnp.dtype(x.dtype).itemsize
    out_itemsize = jnp.dtype(out_dtype).itemsize
    bytes_per_row = width * max(in_itemsize, out_itemsize)
    total_bytes = rows * bytes_per_row
    rows_cap = max(8, (target_block_bytes // bytes_per_row) // 8 * 8)
    n_prog = pl.cdiv(rows, rows_cap)
    if num_cores > 1 and total_bytes >= 2 * 1024 * 1024 and rows >= 2 * 8:
        # v7x-like: even count of near-equal blocks so both TCs stay busy.
        n_prog = _round_up(max(n_prog, num_cores), num_cores)
    tile_rows = min(rows, max(8, _round_up(pl.cdiv(rows, n_prog), 8)))
    grid = (pl.cdiv(rows, tile_rows),)

    out = pl.pallas_call(
        _normalize_kernel,
        out_shape=jax.ShapeDtypeStruct((rows, width), out_dtype),
        grid_spec=pltpu.PrefetchScalarGridSpec(
            num_scalar_prefetch=0,
            grid=grid,
            in_specs=[
                pl.BlockSpec((tile_rows, width), lambda i: (i, 0)),
                pl.BlockSpec((1, width), lambda i: (0, 0)),
                pl.BlockSpec((1, width), lambda i: (0, 0)),
            ],
            out_specs=pl.BlockSpec((tile_rows, width), lambda i: (i, 0)),
        ),
        compiler_params=pltpu.CompilerParams(
            dimension_semantics=("parallel",),
            vmem_limit_bytes=int(vmem_limit),
        ),
    )(x2, mean2, inv2)

    out_flat = out.reshape(-1)
    if padded_total != n_total:
        out_flat = out_flat[:n_total]
    return out_flat.reshape(orig_shape)


if __name__ == "__main__":
    key = jax.random.PRNGKey(0)
    k0, k1, k2 = jax.random.split(key, 3)

    # Deterministic "buffer" parameters (what __init__ would register).
    mean = jnp.array([0.485, 0.456, 0.406, 0.5], dtype=jnp.float32)
    std = jnp.array([0.229, 0.224, 0.225, 0.25], dtype=jnp.float32)
    C = mean.shape[0]

    def ref_fn(x):
        shape = (1,) * (x.ndim - 1) + (C,)
        return (x - mean.reshape(shape)) / std.reshape(shape)

    # 1) Channels-last image batch (the shape the module implies).
    x1 = jax.random.normal(k0, (2, 16, 16, C), dtype=jnp.float32)
    o1 = jax.block_until_ready(normalizer_forward(x1, mean, std))
    assert o1.shape == x1.shape and o1.dtype == x1.dtype
    assert jnp.allclose(o1, ref_fn(x1), atol=1e-5, rtol=1e-5)

    # 2) Awkward shape with no dense divisor (exercises the tail-pad fallback).
    x2 = jax.random.normal(k1, (3, 7, 5, C), dtype=jnp.float32)
    o2 = jax.block_until_ready(normalizer_forward(x2, mean, std))
    assert jnp.allclose(o2, ref_fn(x2), atol=1e-5, rtol=1e-5)

    # 3) Shape whose row count is not a multiple of 8 (full-extent block path).
    x3 = jax.random.normal(k2, (4, 50, 36, C), dtype=jnp.float32)
    o3 = jax.block_until_ready(normalizer_forward(x3, mean, std))
    assert jnp.allclose(o3, ref_fn(x3), atol=1e-5, rtol=1e-5)

    print("KERNEL_OK")
</pallas_src>

<mosaic_0001>
module attributes {stable_mosaic.version = 11 : i64} {
  func.func @_normalize_kernel(%arg0: i32, %arg1: memref<16x128xf32, #tpu.memory_space<vmem>>, %arg2: memref<1x128xf32, #tpu.memory_space<vmem>>, %arg3: memref<1x128xf32, #tpu.memory_space<vmem>>, %arg4: memref<16x128xf32, #tpu.memory_space<vmem>>) attributes {dimension_semantics = [#tpu.dimension_semantics<parallel>], iteration_bounds = array<i64: 1>, scalar_prefetch = 0 : i64, scratch_operands = 0 : i64, tpu.core_type = #tpu.core_type<tc>, window_params = [{transform_indices = @transform_0, window_bounds = array<i64: 16, 128>}, {pipeline_mode = #tpu.pipeline_mode<synchronous>, transform_indices = @transform_1, window_bounds = array<i64: 1, 128>}, {pipeline_mode = #tpu.pipeline_mode<synchronous>, transform_indices = @transform_2, window_bounds = array<i64: 1, 128>}, {transform_indices = @transform_3, window_bounds = array<i64: 16, 128>}]} {
    %c0 = arith.constant 0 : index
    %c0_0 = arith.constant 0 : index
    %0 = vector.load %arg1[%c0, %c0_0] : memref<16x128xf32, #tpu.memory_space<vmem>>, vector<16x128xf32>
    %c0_1 = arith.constant 0 : index
    %c0_2 = arith.constant 0 : index
    %1 = vector.load %arg2[%c0_1, %c0_2] : memref<1x128xf32, #tpu.memory_space<vmem>>, vector<1x128xf32>
    %2 = vector.broadcast %1 : vector<1x128xf32> to vector<16x128xf32>
    %3 = arith.subf %0, %2 : vector<16x128xf32>
    %c0_3 = arith.constant 0 : index
    %c0_4 = arith.constant 0 : index
    %4 = vector.load %arg3[%c0_3, %c0_4] : memref<1x128xf32, #tpu.memory_space<vmem>>, vector<1x128xf32>
    %5 = vector.broadcast %4 : vector<1x128xf32> to vector<16x128xf32>
    %6 = arith.mulf %3, %5 : vector<16x128xf32>
    %c0_5 = arith.constant 0 : index
    %c0_6 = arith.constant 0 : index
    %7 = vector.load %arg4[%c0_5, %c0_6] : memref<16x128xf32, #tpu.memory_space<vmem>>, vector<16x128xf32>
    tpu.vector_store %arg4[%c0_5, %c0_6], %6 {strides = array<i32>} : memref<16x128xf32, #tpu.memory_space<vmem>>, vector<16x128xf32>,
    return
  }
  func.func @transform_0(%arg0: i32) -> (i32, i32) {
    %c0_i32 = arith.constant 0 : i32
    %c0_i32_0 = arith.constant 0 : i32
    return %arg0, %c0_i32 : i32, i32
  }
  func.func @transform_1(%arg0: i32) -> (i32, i32) {
    %c0_i32 = arith.constant 0 : i32
    %c0_i32_0 = arith.constant 0 : i32
    %c0_i32_1 = arith.constant 0 : i32
    return %c0_i32, %c0_i32_0 : i32, i32
  }
  func.func @transform_2(%arg0: i32) -> (i32, i32) {
    %c0_i32 = arith.constant 0 : i32
    %c0_i32_0 = arith.constant 0 : i32
    %c0_i32_1 = arith.constant 0 : i32
    return %c0_i32, %c0_i32_0 : i32, i32
  }
  func.func @transform_3(%arg0: i32) -> (i32, i32) {
    %c0_i32 = arith.constant 0 : i32
    %c0_i32_0 = arith.constant 0 : i32
    return %arg0, %c0_i32 : i32, i32
  }
}

</mosaic_0001>

<llo_original>
// kernel: tpu_custom_call.1
$region0: #{tpu_custom_call.1}
  #allocation0 [shape = 'u32[]', space=smem, size = 0x4, offset = 0x4, fixed_abs, tag = 'smem constant byte address 0x4 - core index']
  #allocation1 [shape = 'u32[144,128]{1,0:T(1,128)}', space=vmem, size = 0x12000, scoped, tag = 'internal scratch']
  %s0 = inlined_call_operand.hbm [shape: f32[16,128], index: 0, kind: input, shape index: {}]
  %s1 = inlined_call_operand.vmem [shape: f32[1,128], index: 1, kind: input, shape index: {}]
  %s2 = inlined_call_operand.vmem [shape: f32[1,128], index: 2, kind: input, shape index: {}]
  %s3 = inlined_call_operand.hbm [shape: f32[16,128], index: 3, kind: output, shape index: {}]
  %s4 = sld [smem:[#allocation0]]
  $region26: #{tpu_custom_call.1} parent=0
    _
  %s6 = ssub.s32 1, %s4
  %s7 = scalar_select 0, %s6, %s4
  $region1: #{tpu_custom_call.1} parent=0
    #allocation2 [shape = 'u8[8192]{0}', space=vmem, size = 0x2000, scoped, tag = 'input window, operand 0, single buffered']
    #allocation3 [shape = 's32[1]{0}', space=sflag, size = 0x4, scoped, tag = 'scoped memory for tpu_custom_call.1']
    #allocation4 [shape = 's32[1]{0}', space=sflag, size = 0x4, scoped, tag = 'scoped memory for tpu_custom_call.1']
    #allocation5 [shape = 'u8[8192]{0}', space=vmem, size = 0x2000, scoped, tag = 'output window, operand 0, single buffered']
    %8 = vsyncpa [#allocation3], 0
    %9 = vsyncpa [#allocation4], 0
    // Predicated region
    $region2: #{tpu_custom_call.1} parent=1 // pred_check
      _
    $region3: #{tpu_custom_call.1} parent=1 // pred_check_branch
      %11 = sbr.rel (0) target = $region5
    $region4: #{tpu_custom_call.1} parent=1 // pred_region
      %s13 = ssub.s32 256, 256
      %14 = vsyncadd [#allocation3], %s13
      %s15 = sshll.u32 [#allocation2], 4
      %s16 = int_to_ptr.vmem [resolvable:$true] %s15
      %21 = dma.hbm_to_vmem [thread:$0]  %s0, 256, %s16, [#allocation3], 128, 128, 8
    $region5: #{tpu_custom_call.1} parent=1 // pred_fallthru
      _
    // Predicated region
    $region6: #{tpu_custom_call.1} parent=1 // pred_check
      _
    $region7: #{tpu_custom_call.1} parent=1 // pred_check_branch
      %23 = sbr.rel (0) target = $region9
    $region8: #{tpu_custom_call.1} parent=1 // pred_region
      _
    $region9: #{tpu_custom_call.1} parent=1 // pred_fallthru
      _
    // Predicated region
    $region10: #{tpu_custom_call.1} parent=1 // pred_check
      _
    $region11: #{tpu_custom_call.1} parent=1 // pred_check_branch
      %25 = sbr.rel (0) target = $region13
    $region12: #{tpu_custom_call.1} parent=1 // pred_region
      _
    $region13: #{tpu_custom_call.1} parent=1 // pred_fallthru
      _
    // Predicated region
    $region14: #{tpu_custom_call.1} parent=1 // pred_check
      _
    $region15: #{tpu_custom_call.1} parent=1 // pred_check_branch
      %27 = sbr.rel (0) target = $region17
    $region16: #{tpu_custom_call.1} parent=1 // pred_region
      %28 = dma.done [#allocation3], 256
    $region17: #{tpu_custom_call.1} parent=1 // pred_fallthru
      _
    %v29 = vld [vmem:[#allocation2] sm:$0xff]
    %v30 = vld [vmem:[#allocation2 + $0x8] sm:$0xff]
    %v31 = vld [vmem:[%s1] sm:$0x1]
    %v33 = vlaneseq
    %v34 = vshrl.u32 %v33, 7
    %v35 = vsub.s32 0, %v34
    %v36 = vrot.slane %v31, %v35
    %v38 = vsub.f32 %v29, %v36
    %v39 = vsub.f32 %v30, %v36
    %v40 = vld [vmem:[%s2] sm:$0x1]
    %v42 = vlaneseq
    %v43 = vshrl.u32 %v42, 7
    %v44 = vsub.s32 0, %v43
    %v45 = vrot.slane %v40, %v44
    %v47 = vmul.f32 %v38, %v45
    %v48 = vmul.f32 %v39, %v45
    %49 = vst [vmem:[#allocation5] sm:$0xff] %v47
    %50 = vst [vmem:[#allocation5 + $0x8] sm:$0xff] %v48
    // Predicated region
    $region18: #{tpu_custom_call.1} parent=1 // pred_check
      _
    $region19: #{tpu_custom_call.1} parent=1 // pred_check_branch
      %52 = sbr.rel (0) target = $region21
    $region20: #{tpu_custom_call.1} parent=1 // pred_region
      %s54 = ssub.s32 256, 256
      %55 = vsyncadd [#allocation4], %s54
      %s56 = sshll.u32 [#allocation5], 4
      %s57 = int_to_ptr.vmem [resolvable:$true] %s56
      %62 = dma.vmem_to_hbm [thread:$0]  %s57, 256, %s3, [#allocation4], 128, 128, 8
    $region21: #{tpu_custom_call.1} parent=1 // pred_fallthru
      _
    // Predicated region
    $region22: #{tpu_custom_call.1} parent=1 // pred_check
      _
    $region23: #{tpu_custom_call.1} parent=1 // pred_check_branch
      %64 = sbr.rel (0) target = $region25
    $region24: #{tpu_custom_call.1} parent=1 // pred_region
      %65 = dma.done [#allocation4], 256
    $region25: #{tpu_custom_call.1} parent=1 // pred_fallthru
      _
    %66 = vsyncpa [#allocation3], 1
    %67 = vsyncpa [#allocation4], 1

</llo_original>
